<compile_context>
chip_gen: v7x
topology: tpu7x:2x2x1
jax: 0.10.0
libtpu: 0.0.40
codegen_flags: <defaults>
</compile_context>

<pallas_src>
import functools

import jax
import jax.numpy as jnp
from jax import lax
from jax.experimental import pallas as pl
from jax.experimental.pallas import tpu as pltpu

LN_EPS = 1e-5  # torch.nn.LayerNorm default


def _round_up(x: int, m: int) -> int:
    return ((x + m - 1) // m) * m


def _vmem_capacity_bytes(default_bytes: int = 64 * 2 ** 20) -> int:
    """Physical VMEM per TensorCore; conservative (v7x) fallback if unknown."""
    try:
        info = pltpu.get_tpu_info()
        cap = getattr(info, "vmem_capacity_bytes", None)
        if cap:
            return int(cap)
    except Exception:
        pass
    return default_bytes


def _cvms_kernel(mask_token,
                 matmul_dtype,
                 content_ref,   # (TM, D_in)   caller dtype
                 item_ref,      # (TM, 1)      i32
                 tmask_ref,     # (1, D_in)    f32  trained_mask
                 ln_w_ref,      # (1, D_in)    f32  LayerNorm weight
                 ln_b_ref,      # (1, D_in)    f32  LayerNorm bias
                 w_ref,         # (D_in, TN)   matmul_dtype (pre-transposed, padded)
                 b_ref,         # (1, TN)      f32  linear bias (padded)
                 out_ref,       # (TM, TN)     f32
                 normed_ref):   # (TM, D_in)   matmul_dtype VMEM scratch (cache)
    # Mask + LayerNorm once per row tile; reuse the cached cast result for every
    # output-feature tile of this row tile (axis 1 is "arbitrary", so all j run
    # consecutively on the same core and the scratch persists between them).
    @pl.when(pl.program_id(1) == 0)
    def _():
        x = content_ref[...].astype(jnp.float32)
        is_masked = item_ref[...] == mask_token               # (TM, 1) bool
        seq = jnp.where(is_masked, tmask_ref[...], x)         # (TM, D_in)

        # Two-pass mean / variance (biased, like torch.nn.LayerNorm).
        mean = jnp.mean(seq, axis=-1, keepdims=True)
        centered = seq - mean
        var = jnp.mean(centered * centered, axis=-1, keepdims=True)
        normed = centered * lax.rsqrt(var + LN_EPS)
        normed = normed * ln_w_ref[...] + ln_b_ref[...]
        normed_ref[...] = normed.astype(matmul_dtype)

    # Linear: normed @ W^T + b.  MXU matmul (bf16 by default), f32 accumulation.
    out_ref[...] = (
        jnp.dot(normed_ref[...], w_ref[...], preferred_element_type=jnp.float32)
        + b_ref[...]
    )


def content_vector_mask_and_scale(content_sequence,   # [B, S, D_in]
                                  item_sequence,      # [B, S]        int
                                  trained_mask,       # [D_in]        f32
                                  ln_weight,          # [D_in]        f32
                                  ln_bias,            # [D_in]        f32
                                  lin_weight,         # [D_out, D_in] f32 (torch layout)
                                  lin_bias,           # [D_out]       f32
                                  item_mask_token: int,
                                  *,
                                  tile_rows: int = 512,
                                  dout_tile: int = 1024,
                                  matmul_dtype=jnp.bfloat16):
    B, S, D_in = content_sequence.shape
    D_out = lin_weight.shape[0]
    N = B * S

    in_itemsize = jnp.dtype(content_sequence.dtype).itemsize
    w_itemsize = jnp.dtype(matmul_dtype).itemsize

    # --- Output-feature tiling (lane-dense, multiples of 128). --------------
    d_out_128 = _round_up(D_out, 128)
    if D_in * d_out_128 * w_itemsize * 2 <= 8 * 2 ** 20:
        tn = d_out_128                       # whole weight stays resident; one j tile
    else:
        tn = min(_round_up(dout_tile, 128), d_out_128)
    n_j = pl.cdiv(d_out_128, tn)
    D_out_p = n_j * tn

    # --- Row tiling: multiple of 16 (packed bf16 sublanes). -----------------
    tile_rows = max(16, (tile_rows // 16) * 16)
    tile_rows = min(tile_rows, _round_up(N, 16))
    # Ensure >= 2 row tiles when possible so v7x's two TensorCores both work.
    tile_rows = min(tile_rows, max(16, _round_up(pl.cdiv(N, 2), 16)))

    vmem_cap = _vmem_capacity_bytes()
    limit_cap = (vmem_cap * 3) // 4          # leave headroom for Mosaic internals

    def _est(tm):
        return (2 * (tm * D_in * in_itemsize          # content block (dbl-buffered)
                     + tm * 128 * 4                   # item ids (lane-padded)
                     + 3 * D_in * 4                   # trained_mask / ln_w / ln_b
                     + D_in * tn * w_itemsize         # weight tile
                     + 8 * tn * 4                     # bias tile (sublane-padded)
                     + tm * tn * 4)                   # output tile
                + tm * D_in * w_itemsize)             # cached `normed` scratch

    while _est(tile_rows) > limit_cap and tile_rows > 16:
        tile_rows = max(16, (tile_rows // 2 // 16) * 16)
    n_i = pl.cdiv(N, tile_rows)

    vmem_limit = int(min(max(int(1.5 * _est(tile_rows)), 32 * 2 ** 20), limit_cap))

    # --- Operand prep: no activation padding / copies. ----------------------
    x = content_sequence.reshape(N, D_in)                   # keep caller dtype
    items = item_sequence.reshape(N, 1).astype(jnp.int32)
    tmask = trained_mask.reshape(1, D_in).astype(jnp.float32)
    ln_w = ln_weight.reshape(1, D_in).astype(jnp.float32)
    ln_b = ln_bias.reshape(1, D_in).astype(jnp.float32)

    # TODO(synk): hoist the weight transpose/cast/pad out of the per-call path
    # for inference loops (it is pure parameter prep).
    w_t = lin_weight.T.astype(matmul_dtype)                 # (D_in, D_out)
    b = lin_bias.reshape(1, D_out).astype(jnp.float32)
    if D_out_p != D_out:
        w_t = jnp.pad(w_t, ((0, 0), (0, D_out_p - D_out)))
        b = jnp.pad(b, ((0, 0), (0, D_out_p - D_out)))

    cost = pl.CostEstimate(
        flops=2 * N * D_in * D_out_p,
        transcendentals=N,                                  # one rsqrt per row
        bytes_accessed=(N * D_in * in_itemsize + N * 4
                        + D_in * D_out_p * w_itemsize + N * D_out_p * 4
                        + 4 * D_in * 4 + D_out_p * 4),
    )

    out = pl.pallas_call(
        functools.partial(_cvms_kernel, item_mask_token, matmul_dtype),
        out_shape=jax.ShapeDtypeStruct((N, D_out_p), jnp.float32),
        grid_spec=pltpu.PrefetchScalarGridSpec(
            num_scalar_prefetch=0,
            grid=(n_i, n_j),
            in_specs=[
                pl.BlockSpec((tile_rows, D_in), lambda i, j: (i, 0)),   # content rows
                pl.BlockSpec((tile_rows, 1), lambda i, j: (i, 0)),      # item ids
                pl.BlockSpec((1, D_in), lambda i, j: (0, 0)),           # trained_mask
                pl.BlockSpec((1, D_in), lambda i, j: (0, 0)),           # ln weight
                pl.BlockSpec((1, D_in), lambda i, j: (0, 0)),           # ln bias
                pl.BlockSpec((D_in, tn), lambda i, j: (0, j)),          # weight^T tile
                pl.BlockSpec((1, tn), lambda i, j: (0, j)),             # bias tile
            ],
            out_specs=pl.BlockSpec((tile_rows, tn), lambda i, j: (i, j)),
            scratch_shapes=[pltpu.VMEM((tile_rows, D_in), matmul_dtype)],
        ),
        compiler_params=pltpu.CompilerParams(
            # Row tiles shard across v7x's two TensorCores; the D_out axis must
            # stay sequential on one core so the cached `normed` scratch is valid.
            dimension_semantics=("parallel", "arbitrary"),
            vmem_limit_bytes=vmem_limit),
        cost_estimate=cost,
    )(x, items, tmask, ln_w, ln_b, w_t, b)

    return out[:, :D_out].reshape(B, S, D_out)


def _reference(content, items, tmask, ln_w, ln_b, lin_w, lin_b, mask_token):
    mask = (items == mask_token)[..., None]
    seq = jnp.where(mask, tmask, content.astype(jnp.float32))
    mean = jnp.mean(seq, axis=-1, keepdims=True)
    var = jnp.mean((seq - mean) ** 2, axis=-1, keepdims=True)
    normed = (seq - mean) / jnp.sqrt(var + LN_EPS) * ln_w + ln_b
    return normed @ lin_w.T + lin_b


def _make_inputs(key, B, S, D_in, D_out):
    k_content, k_items, k_tmask, k_w, k_b = jax.random.split(key, 5)
    content = jax.random.normal(k_content, (B, S, D_in), dtype=jnp.float32)
    items = jax.random.randint(k_items, (B, S), 0, 10, dtype=jnp.int32)
    # trained_mask ~ Normal(mean=1, std=0.5); LayerNorm defaults weight=1, bias=0.
    trained_mask = 1.0 + 0.5 * jax.random.normal(k_tmask, (D_in,), dtype=jnp.float32)
    ln_weight = jnp.ones((D_in,), dtype=jnp.float32)
    ln_bias = jnp.zeros((D_in,), dtype=jnp.float32)
    bound = 1.0 / jnp.sqrt(jnp.float32(D_in))
    lin_weight = jax.random.uniform(k_w, (D_out, D_in), minval=-bound, maxval=bound,
                                    dtype=jnp.float32)
    lin_bias = jax.random.uniform(k_b, (D_out,), minval=-bound, maxval=bound,
                                  dtype=jnp.float32)
    return content, items, trained_mask, ln_weight, ln_bias, lin_weight, lin_bias


if __name__ == "__main__":
    ITEM_MASK_TOKEN = 7
    key = jax.random.PRNGKey(0)
    k1, k2 = jax.random.split(key)

    # Case 1: small shapes matching the module's forward (exact tile fit).
    B, S, D_in, D_out = 2, 8, 32, 32
    args = _make_inputs(k1, B, S, D_in, D_out)
    out = content_vector_mask_and_scale(*args, ITEM_MASK_TOKEN)
    out = jax.block_until_ready(out)
    ref = _reference(*args, ITEM_MASK_TOKEN)
    assert out.shape == (B, S, D_out)
    # bf16 matmul operands with f32 accumulation -> slightly looser tolerance.
    assert jnp.allclose(out, ref, atol=2e-2, rtol=2e-2), "mismatch vs reference (case 1)"

    # Case 2: exercises the partial last row block (N=21) and D_out 128-padding.
    B2, S2, D_in2, D_out2 = 3, 7, 48, 160
    args2 = _make_inputs(k2, B2, S2, D_in2, D_out2)
    out2 = content_vector_mask_and_scale(*args2, ITEM_MASK_TOKEN)
    out2 = jax.block_until_ready(out2)
    ref2 = _reference(*args2, ITEM_MASK_TOKEN)
    assert out2.shape == (B2, S2, D_out2)
    assert jnp.allclose(out2, ref2, atol=2e-2, rtol=2e-2), "mismatch vs reference (case 2)"

    print("KERNEL_OK")
</pallas_src>

<mosaic_0001>
module attributes {stable_mosaic.version = 11 : i64} {
  func.func @_cvms_kernel(%arg0: i32, %arg1: i32, %arg2: memref<16x32xf32, #tpu.memory_space<vmem>>, %arg3: memref<16x1xi32, #tpu.memory_space<vmem>>, %arg4: memref<1x32xf32, #tpu.memory_space<vmem>>, %arg5: memref<1x32xf32, #tpu.memory_space<vmem>>, %arg6: memref<1x32xf32, #tpu.memory_space<vmem>>, %arg7: memref<32x128xbf16, #tpu.memory_space<vmem>>, %arg8: memref<1x128xf32, #tpu.memory_space<vmem>>, %arg9: memref<16x128xf32, #tpu.memory_space<vmem>>, %arg10: memref<16x32xbf16, #tpu.memory_space<vmem>>) attributes {dimension_semantics = [#tpu.dimension_semantics<parallel>, #tpu.dimension_semantics<arbitrary>], iteration_bounds = array<i64: 1, 1>, scalar_prefetch = 0 : i64, scratch_operands = 1 : i64, tpu.core_type = #tpu.core_type<tc>, window_params = [{transform_indices = @transform_0, window_bounds = array<i64: 16, 32>}, {transform_indices = @transform_1, window_bounds = array<i64: 16, 1>}, {pipeline_mode = #tpu.pipeline_mode<synchronous>, transform_indices = @transform_2, window_bounds = array<i64: 1, 32>}, {pipeline_mode = #tpu.pipeline_mode<synchronous>, transform_indices = @transform_3, window_bounds = array<i64: 1, 32>}, {pipeline_mode = #tpu.pipeline_mode<synchronous>, transform_indices = @transform_4, window_bounds = array<i64: 1, 32>}, {transform_indices = @transform_5, window_bounds = array<i64: 32, 128>}, {transform_indices = @transform_6, window_bounds = array<i64: 1, 128>}, {transform_indices = @transform_7, window_bounds = array<i64: 16, 128>}]} {
    %c0_i32 = arith.constant 0 : i32
    %0 = arith.cmpi eq, %arg1, %c0_i32 : i32
    %1 = arith.extui %0 : i1 to i32
    %c0_i32_0 = arith.constant 0 : i32
    %2 = arith.cmpi ne, %1, %c0_i32_0 : i32
    scf.if %2 {
      %c0_8 = arith.constant 0 : index
      %c0_9 = arith.constant 0 : index
      %10 = vector.load %arg2[%c0_8, %c0_9] : memref<16x32xf32, #tpu.memory_space<vmem>>, vector<16x32xf32>
      %c0_10 = arith.constant 0 : index
      %c0_11 = arith.constant 0 : index
      %11 = vector.load %arg3[%c0_10, %c0_11] : memref<16x1xi32, #tpu.memory_space<vmem>>, vector<16x1xi32>
      %c7_i32 = arith.constant 7 : i32
      %12 = vector.broadcast %c7_i32 : i32 to vector<16x1xi32>
      %13 = arith.cmpi eq, %11, %12 : vector<16x1xi32>
      %c0_12 = arith.constant 0 : index
      %c0_13 = arith.constant 0 : index
      %14 = vector.load %arg4[%c0_12, %c0_13] : memref<1x32xf32, #tpu.memory_space<vmem>>, vector<1x32xf32>
      %15 = vector.shape_cast %13 : vector<16x1xi1> to vector<16x1xi1>
      %16 = vector.broadcast %15 : vector<16x1xi1> to vector<16x32xi1>
      %17 = vector.shape_cast %14 : vector<1x32xf32> to vector<1x32xf32>
      %18 = vector.broadcast %17 : vector<1x32xf32> to vector<16x32xf32>
      %19 = arith.select %16, %18, %10 : vector<16x32xi1>, vector<16x32xf32>
      %cst_14 = arith.constant dense<0.000000e+00> : vector<16xf32>
      %20 = vector.multi_reduction <add>, %19, %cst_14 [1] : vector<16x32xf32> to vector<16xf32>
      %21 = vector.shape_cast %20 : vector<16xf32> to vector<16x1xf32>
      %cst_15 = arith.constant 3.200000e+01 : f32
      %22 = vector.broadcast %cst_15 : f32 to vector<16x1xf32>
      %23 = arith.divf %21, %22 : vector<16x1xf32>
      %24 = vector.broadcast %23 : vector<16x1xf32> to vector<16x32xf32>
      %25 = arith.subf %19, %24 : vector<16x32xf32>
      %26 = arith.mulf %25, %25 : vector<16x32xf32>
      %cst_16 = arith.constant dense<0.000000e+00> : vector<16xf32>
      %27 = vector.multi_reduction <add>, %26, %cst_16 [1] : vector<16x32xf32> to vector<16xf32>
      %28 = vector.shape_cast %27 : vector<16xf32> to vector<16x1xf32>
      %cst_17 = arith.constant 3.200000e+01 : f32
      %29 = vector.broadcast %cst_17 : f32 to vector<16x1xf32>
      %30 = arith.divf %28, %29 : vector<16x1xf32>
      %cst_18 = arith.constant 9.99999974E-6 : f32
      %31 = vector.broadcast %cst_18 : f32 to vector<16x1xf32>
      %32 = arith.addf %30, %31 : vector<16x1xf32>
      %33 = math.rsqrt %32 : vector<16x1xf32>
      %34 = vector.broadcast %33 : vector<16x1xf32> to vector<16x32xf32>
      %35 = arith.mulf %25, %34 : vector<16x32xf32>
      %c0_19 = arith.constant 0 : index
      %c0_20 = arith.constant 0 : index
      %36 = vector.load %arg5[%c0_19, %c0_20] : memref<1x32xf32, #tpu.memory_space<vmem>>, vector<1x32xf32>
      %37 = vector.broadcast %36 : vector<1x32xf32> to vector<16x32xf32>
      %38 = arith.mulf %35, %37 : vector<16x32xf32>
      %c0_21 = arith.constant 0 : index
      %c0_22 = arith.constant 0 : index
      %39 = vector.load %arg6[%c0_21, %c0_22] : memref<1x32xf32, #tpu.memory_space<vmem>>, vector<1x32xf32>
      %40 = vector.broadcast %39 : vector<1x32xf32> to vector<16x32xf32>
      %41 = arith.addf %38, %40 : vector<16x32xf32>
      %42 = arith.truncf %41 : vector<16x32xf32> to vector<16x32xbf16>
      %c0_23 = arith.constant 0 : index
      %c0_24 = arith.constant 0 : index
      %43 = vector.load %arg10[%c0_23, %c0_24] : memref<16x32xbf16, #tpu.memory_space<vmem>>, vector<16x32xbf16>
      tpu.vector_store %arg10[%c0_23, %c0_24], %42 {strides = array<i32>} : memref<16x32xbf16, #tpu.memory_space<vmem>>, vector<16x32xbf16>,
    } else {
    }
    %c0 = arith.constant 0 : index
    %c0_1 = arith.constant 0 : index
    %3 = vector.load %arg10[%c0, %c0_1] : memref<16x32xbf16, #tpu.memory_space<vmem>>, vector<16x32xbf16>
    %c0_2 = arith.constant 0 : index
    %c0_3 = arith.constant 0 : index
    %4 = vector.load %arg7[%c0_2, %c0_3] : memref<32x128xbf16, #tpu.memory_space<vmem>>, vector<32x128xbf16>
    %cst = arith.constant dense<0.000000e+00> : vector<16x128xf32>
    %5 = tpu.matmul %3, %4, %cst {dimension_numbers = #tpu.dot_dimension_numbers<[1], [0], [0], [1], [0, 0, 1, 1], [], []>} : vector<16x32xbf16>, vector<32x128xbf16>, vector<16x128xf32> -> vector<16x128xf32>
    %c0_4 = arith.constant 0 : index
    %c0_5 = arith.constant 0 : index
    %6 = vector.load %arg8[%c0_4, %c0_5] : memref<1x128xf32, #tpu.memory_space<vmem>>, vector<1x128xf32>
    %7 = vector.broadcast %6 : vector<1x128xf32> to vector<16x128xf32>
    %8 = arith.addf %5, %7 : vector<16x128xf32>
    %c0_6 = arith.constant 0 : index
    %c0_7 = arith.constant 0 : index
    %9 = vector.load %arg9[%c0_6, %c0_7] : memref<16x128xf32, #tpu.memory_space<vmem>>, vector<16x128xf32>
    tpu.vector_store %arg9[%c0_6, %c0_7], %8 {strides = array<i32>} : memref<16x128xf32, #tpu.memory_space<vmem>>, vector<16x128xf32>,
    return
  }
  func.func @transform_0(%arg0: i32, %arg1: i32) -> (i32, i32) {
    %c0_i32 = arith.constant 0 : i32
    %c0_i32_0 = arith.constant 0 : i32
    return %arg0, %c0_i32 : i32, i32
  }
  func.func @transform_1(%arg0: i32, %arg1: i32) -> (i32, i32) {
    %c0_i32 = arith.constant 0 : i32
    %c0_i32_0 = arith.constant 0 : i32
    return %arg0, %c0_i32 : i32, i32
  }
  func.func @transform_2(%arg0: i32, %arg1: i32) -> (i32, i32) {
    %c0_i32 = arith.constant 0 : i32
    %c0_i32_0 = arith.constant 0 : i32
    %c0_i32_1 = arith.constant 0 : i32
    return %c0_i32, %c0_i32_0 : i32, i32
  }
  func.func @transform_3(%arg0: i32, %arg1: i32) -> (i32, i32) {
    %c0_i32 = arith.constant 0 : i32
    %c0_i32_0 = arith.constant 0 : i32
    %c0_i32_1 = arith.constant 0 : i32
    return %c0_i32, %c0_i32_0 : i32, i32
  }
  func.func @transform_4(%arg0: i32, %arg1: i32) -> (i32, i32) {
    %c0_i32 = arith.constant 0 : i32
    %c0_i32_0 = arith.constant 0 : i32
    %c0_i32_1 = arith.constant 0 : i32
    return %c0_i32, %c0_i32_0 : i32, i32
  }
  func.func @transform_5(%arg0: i32, %arg1: i32) -> (i32, i32) {
    %c0_i32 = arith.constant 0 : i32
    %c0_i32_0 = arith.constant 0 : i32
    return %c0_i32, %arg1 : i32, i32
  }
  func.func @transform_6(%arg0: i32, %arg1: i32) -> (i32, i32) {
    %c0_i32 = arith.constant 0 : i32
    %c0_i32_0 = arith.constant 0 : i32
    return %c0_i32, %arg1 : i32, i32
  }
  func.func @transform_7(%arg0: i32, %arg1: i32) -> (i32, i32) {
    %c0_i32 = arith.constant 0 : i32
    return %arg0, %arg1 : i32, i32
  }
}

</mosaic_0001>

<llo_original>
// kernel: tpu_custom_call.1
$region0: #{tpu_custom_call.1}
  #allocation0 [shape = 'u32[]', space=smem, size = 0x4, offset = 0x4, fixed_abs, tag = 'smem constant byte address 0x4 - core index']
  #allocation1 [shape = 'u32[144,128]{1,0:T(1,128)}', space=vmem, size = 0x12000, scoped, tag = 'internal scratch']
  #allocation2 [shape = 'bf16[16,32]{1,0:T(16,128)(2,1)}', space=vmem, size = 0x1000, scoped, tag = 'scratch operand']
  %s0 = inlined_call_operand.vmem [shape: f32[16,32], index: 0, kind: input, shape index: {}]
  %s1 = inlined_call_operand.vmem [shape: s32[16,1], index: 1, kind: input, shape index: {}]
  %s2 = inlined_call_operand.hbm [shape: f32[1,32], index: 2, kind: input, shape index: {}]
  %s3 = inlined_call_operand.hbm [shape: f32[1,32], index: 3, kind: input, shape index: {}]
  %s4 = inlined_call_operand.hbm [shape: f32[1,32], index: 4, kind: input, shape index: {}]
  %s5 = inlined_call_operand.vmem [shape: bf16[32,128], index: 5, kind: input, shape index: {}]
  %s6 = inlined_call_operand.vmem [shape: f32[1,128], index: 6, kind: input, shape index: {}]
  %s7 = inlined_call_operand.hbm [shape: f32[16,128], index: 7, kind: output, shape index: {}]
  %s8 = sld [smem:[#allocation0]]
  $region54: #{tpu_custom_call.1} parent=0
    _
  %s10 = ssub.s32 1, %s8
  %s11 = scalar_select 0, %s10, %s8
  $region1: #{tpu_custom_call.1} parent=0
    #allocation3 [shape = 'u8[512]{0}', space=vmem, size = 0x400, scoped, tag = 'input window, operand 2, single buffered']
    #allocation4 [shape = 's32[1]{0}', space=sflag, size = 0x4, scoped, tag = 'scoped memory for tpu_custom_call.1']
    #allocation5 [shape = 's32[1]{0}', space=sflag, size = 0x4, scoped, tag = 'scoped memory for tpu_custom_call.1']
    #allocation6 [shape = 'u8[512]{0}', space=vmem, size = 0x400, scoped, tag = 'input window, operand 3, single buffered']
    #allocation7 [shape = 's32[1]{0}', space=sflag, size = 0x4, scoped, tag = 'scoped memory for tpu_custom_call.1']
    #allocation8 [shape = 'u8[512]{0}', space=vmem, size = 0x400, scoped, tag = 'input window, operand 4, single buffered']
    #allocation9 [shape = 'u8[8192]{0}', space=vmem, size = 0x2000, scoped, tag = 'output window, operand 0, single buffered']
    %12 = vsyncpa [#allocation4], 0
    %13 = vsyncpa [#allocation7], 0
    %14 = vsyncpa [#allocation5], 0
    // Predicated region
    $region2: #{tpu_custom_call.1} parent=1 // pred_check
      _
    $region3: #{tpu_custom_call.1} parent=1 // pred_check_branch
      %16 = sbr.rel (0) target = $region5
    $region4: #{tpu_custom_call.1} parent=1 // pred_region
      _
    $region5: #{tpu_custom_call.1} parent=1 // pred_fallthru
      _
    // Predicated region
    $region6: #{tpu_custom_call.1} parent=1 // pred_check
      _
    $region7: #{tpu_custom_call.1} parent=1 // pred_check_branch
      %18 = sbr.rel (0) target = $region9
    $region8: #{tpu_custom_call.1} parent=1 // pred_region
      _
    $region9: #{tpu_custom_call.1} parent=1 // pred_fallthru
      _
    // Predicated region
    $region10: #{tpu_custom_call.1} parent=1 // pred_check
      _
    $region11: #{tpu_custom_call.1} parent=1 // pred_check_branch
      %20 = sbr.rel (0) target = $region13
    $region12: #{tpu_custom_call.1} parent=1 // pred_region
      %s22 = ssub.s32 16, 16
      %23 = vsyncadd [#allocation4], %s22
      %s25 = sshll.u32 [#allocation3], 4
      %s26 = int_to_ptr.vmem [resolvable:$true] %s25
      %28 = dma.hbm_to_vmem [thread:$0]  %s2, 16, %s26, [#allocation4]
    $region13: #{tpu_custom_call.1} parent=1 // pred_fallthru
      _
    // Predicated region
    $region14: #{tpu_custom_call.1} parent=1 // pred_check
      _
    $region15: #{tpu_custom_call.1} parent=1 // pred_check_branch
      %30 = sbr.rel (0) target = $region17
    $region16: #{tpu_custom_call.1} parent=1 // pred_region
      %s32 = ssub.s32 16, 16
      %33 = vsyncadd [#allocation7], %s32
      %s35 = sshll.u32 [#allocation6], 4
      %s36 = int_to_ptr.vmem [resolvable:$true] %s35
      %38 = dma.hbm_to_vmem [thread:$0]  %s3, 16, %s36, [#allocation7]
    $region17: #{tpu_custom_call.1} parent=1 // pred_fallthru
      _
    // Predicated region
    $region18: #{tpu_custom_call.1} parent=1 // pred_check
      _
    $region19: #{tpu_custom_call.1} parent=1 // pred_check_branch
      %40 = sbr.rel (0) target = $region21
    $region20: #{tpu_custom_call.1} parent=1 // pred_region
      %s42 = ssub.s32 16, 16
      %43 = vsyncadd [#allocation7], %s42
      %s45 = sshll.u32 [#allocation8], 4
      %s46 = int_to_ptr.vmem [resolvable:$true] %s45
      %48 = dma.hbm_to_vmem [thread:$0]  %s4, 16, %s46, [#allocation7]
    $region21: #{tpu_custom_call.1} parent=1 // pred_fallthru
      _
    // Predicated region
    $region22: #{tpu_custom_call.1} parent=1 // pred_check
      _
    $region23: #{tpu_custom_call.1} parent=1 // pred_check_branch
      %50 = sbr.rel (0) target = $region25
    $region24: #{tpu_custom_call.1} parent=1 // pred_region
      _
    $region25: #{tpu_custom_call.1} parent=1 // pred_fallthru
      _
    // Predicated region
    $region26: #{tpu_custom_call.1} parent=1 // pred_check
      _
    $region27: #{tpu_custom_call.1} parent=1 // pred_check_branch
      %52 = sbr.rel (0) target = $region29
    $region28: #{tpu_custom_call.1} parent=1 // pred_region
      _
    $region29: #{tpu_custom_call.1} parent=1 // pred_fallthru
      _
    // Predicated region
    $region30: #{tpu_custom_call.1} parent=1 // pred_check
      _
    $region31: #{tpu_custom_call.1} parent=1 // pred_check_branch
      %54 = sbr.rel (0) target = $region33
    $region32: #{tpu_custom_call.1} parent=1 // pred_region
      %55 = dma.done [#allocation4], 16
    $region33: #{tpu_custom_call.1} parent=1 // pred_fallthru
      _
    // Predicated region
    $region34: #{tpu_custom_call.1} parent=1 // pred_check
      _
    $region35: #{tpu_custom_call.1} parent=1 // pred_check_branch
      %57 = sbr.rel (0) target = $region37
    $region36: #{tpu_custom_call.1} parent=1 // pred_region
      %58 = dma.done [#allocation7], 16
    $region37: #{tpu_custom_call.1} parent=1 // pred_fallthru
      _
    // Predicated region
    $region38: #{tpu_custom_call.1} parent=1 // pred_check
      _
    $region39: #{tpu_custom_call.1} parent=1 // pred_check_branch
      %60 = sbr.rel (0) target = $region41
    $region40: #{tpu_custom_call.1} parent=1 // pred_region
      %61 = dma.done [#allocation7], 16
    $region41: #{tpu_custom_call.1} parent=1 // pred_fallthru
      _
    %p63 = scmp.eq.s32.totalorder 0, 0
    // Predicated region
    $region42: #{tpu_custom_call.1} parent=1 // pred_check
      %p64 = pneg %p63
    $region43: #{tpu_custom_call.1} parent=1 // pred_check_branch
      %66 = sbr.rel (%p64) target = $region45
    $region44: #{tpu_custom_call.1} parent=1 // pred_region
      %v67 = vld [vmem:[%s0] sm:$0xff]
      %v68 = vld [vmem:[%s0 + $0x8] sm:$0xff]
      %v69 = vld [vmem:[%s1] sm:$0xff]
      %v70 = vld [vmem:[%s1 + $0x8] sm:$0xff]
      %vm71 = vcmp.eq.s32.totalorder %v69, 7
      %vm72 = vcmp.eq.s32.totalorder %v70, 7
      %v73 = vld [vmem:[#allocation3] sm:$0x1]
      %v74 = vsel %vm71, 1, 0
      %v75 = vsel %vm72, 1, 0
      %76 = vset.pattern.permute.xlu0 0
      %77 = vperm.xlu0 %76, %v74
      %v78 = vpop.permute.xlu0 %77
      %79 = vset.pattern.permute.xlu0 0
      %80 = vperm.xlu0 %79, %v75
      %v81 = vpop.permute.xlu0 %80
      %vm82 = vcmp.eq.s32.totalorder %v78, 1
      %vm83 = vcmp.eq.s32.totalorder %v81, 1
      %v85 = vlaneseq
      %v86 = vshrl.u32 %v85, 7
      %v87 = vsub.s32 0, %v86
      %v88 = vrot.slane %v73, %v87
      %v90 = vsel %vm82, %v88, %v67
      %v91 = vsel %vm83, %v88, %v68
      %vm92 = vcmask 261120
      %v93 = vsel %vm92, %v90, 0.0
      %94 = vadd.xlane.f32.xlu0 %v93
      %v95 = vpop.xlane.xlu0 %94
      %v96 = vsel %vm92, %v91, 0.0
      %97 = vadd.xlane.f32.xlu0 %v96
      %v98 = vpop.xlane.xlu0 %97
      %v99 = vrcp.pop 32.0
      %v100 = vmul.f32 %v95, %v99
      %v101 = vmul.f32 %v98, %v99
      %v102 = vsub.f32 %v90, %v100
      %v103 = vsub.f32 %v91, %v101
      %v104 = vmul.f32 %v102, %v102
      %v105 = vmul.f32 %v103, %v103
      %v106 = vsel %vm92, %v104, 0.0
      %107 = vadd.xlane.f32.xlu0 %v106
      %v108 = vpop.xlane.xlu0 %107
      %v109 = vsel %vm92, %v105, 0.0
      %110 = vadd.xlane.f32.xlu0 %v109
      %v111 = vpop.xlane.xlu0 %110
      %v112 = vmul.f32 %v108, %v99
      %v113 = vmul.f32 %v111, %v99
      %v114 = vadd.f32 %v112, 1e-05
      %v115 = vadd.f32 %v113, 1e-05
      %v116 = vrsqrt.pop %v114
      %v117 = vrsqrt.pop %v115
      %v118 = vmul.f32 %v102, %v116
      %v119 = vmul.f32 %v103, %v117
      %v120 = vld [vmem:[#allocation6] sm:$0x1]
      %v122 = vlaneseq
      %v123 = vshrl.u32 %v122, 7
      %v124 = vsub.s32 0, %v123
      %v125 = vrot.slane %v120, %v124
      %v127 = vmul.f32 %v118, %v125
      %v128 = vmul.f32 %v119, %v125
      %v129 = vld [vmem:[#allocation8] sm:$0x1]
      %v131 = vlaneseq
      %v132 = vshrl.u32 %v131, 7
      %v133 = vsub.s32 0, %v132
      %v134 = vrot.slane %v129, %v133
      %v136 = vadd.f32 %v127, %v134
      %v137 = vadd.f32 %v128, %v134
      %v138 = vpack.c.bf16 %v137, %v136
      %139 = vst.msk [vmem:[#allocation2] sm:$0xff] %vm92, %v138
    $region45: #{tpu_custom_call.1} parent=1 // pred_fallthru
      _
    %v140 = vld [vmem:[#allocation2] sm:$0xff]
    %v141 = vld [vmem:[%s5] sm:$0xf]
    %v142 = vld [vmem:[%s5 + $0x4] sm:$0xf]
    %v143 = vld [vmem:[%s5 + $0x8] sm:$0xf]
    %v144 = vld [vmem:[%s5 + $0xc] sm:$0xf]
    %v145 = vld [vmem:[%s6] sm:$0x1]
    %v147 = vlaneseq
    %v148 = vshrl.u32 %v147, 7
    %v149 = vsub.s32 0, %v148
    %v150 = vrot.slane %v145, %v149
    %v156 = vunpack.c.l.b16 %v141
    %v157 = vunpack.c.l.b16 %v142
    %v158 = vunpack.c.l.b16 %v143
    %v159 = vunpack.c.l.b16 %v144
    %v160 = vpack.c.b16 %v157, %v156
    %v161 = vpack.c.b16 %v159, %v158
    %vm164 = vcmask 261120
    %v166 = vsel %vm164, %v140, 0
    %168 = vmatprep.subr.bf16.mxu0 0
    %169 = vmatpush1.bf16.msra.mxu0 %v160
    %170 = vmatprep.subr.bf16.mxu0 0
    %171 = vmatpush1.bf16.msra.mxu0 %v161
    %172 = vmatprep.subr.bf16.mxu0 0
    %173 = vmatpush1.bf16.msra.mxu0 0
    %174 = vmatprep.subr.bf16.mxu0 0
    %175 = vmatpush1.bf16.msra.mxu0 0
    %176 = vmatprep.subr.bf16.mxu0 0
    %177 = vmatpush1.bf16.msra.mxu0 0
    %178 = vmatprep.subr.bf16.mxu0 0
    %179 = vmatpush1.bf16.msra.mxu0 0
    %180 = vmatprep.subr.bf16.mxu0 0
    %181 = vmatpush1.bf16.msra.mxu0 0
    %182 = vmatprep.subr.bf16.mxu0 0
    %183 = vmatpush1.bf16.msra.mxu0 0
    %184 = vmatprep.subr.bf16.mxu0 0
    %185 = vmatpush1.bf16.msra.mxu0 0
    %186 = vmatprep.subr.bf16.mxu0 0
    %187 = vmatpush1.bf16.msra.mxu0 0
    %188 = vmatprep.subr.bf16.mxu0 0
    %189 = vmatpush1.bf16.msra.mxu0 0
    %190 = vmatprep.subr.bf16.mxu0 0
    %191 = vmatpush1.bf16.msra.mxu0 0
    %192 = vmatprep.subr.bf16.mxu0 0
    %193 = vmatpush1.bf16.msra.mxu0 0
    %194 = vmatprep.subr.bf16.mxu0 0
    %195 = vmatpush1.bf16.msra.mxu0 0
    %196 = vmatprep.subr.bf16.mxu0 0
    %197 = vmatpush1.bf16.msra.mxu0 0
    %198 = vmatprep.subr.bf16.mxu0 0
    %199 = vmatpush1.bf16.msra.mxu0 0
    %200 = vmatprep.mubr.bf16.mxu0 0
    %201 = vmatmul.mubr.bf16.gmra.mrb[0].mxu0 %v166
    %v202 = vpop.f32.mrb[0].mxu0
    %v203 = vadd.f32 %v150, %v202
    %v204 = vpop.f32.mrb[0].mxu0
    %v205 = vpop.f32.mrb[0].mxu0
    %v206 = vadd.f32 %v150, %v205
    %v207 = vpop.f32.mrb[0].mxu0
    %208 = vdwg.mxu0
    %209 = vst [vmem:[#allocation9] sm:$0xff] %v203
    %210 = vst [vmem:[#allocation9 + $0x8] sm:$0xff] %v206
    // Predicated region
    $region46: #{tpu_custom_call.1} parent=1 // pred_check
      _
    $region47: #{tpu_custom_call.1} parent=1 // pred_check_branch
      %212 = sbr.rel (0) target = $region49
    $region48: #{tpu_custom_call.1} parent=1 // pred_region
      %s214 = ssub.s32 256, 256
      %215 = vsyncadd [#allocation5], %s214
      %s216 = sshll.u32 [#allocation9], 4
      %s217 = int_to_ptr.vmem [resolvable:$true] %s216
      %222 = dma.vmem_to_hbm [thread:$0]  %s217, 256, %s7, [#allocation5], 128, 128, 8
    $region49: #{tpu_custom_call.1} parent=1 // pred_fallthru
      _
    // Predicated region
    $region50: #{tpu_custom_call.1} parent=1 // pred_check
      _
    $region51: #{tpu_custom_call.1} parent=1 // pred_check_branch
      %224 = sbr.rel (0) target = $region53
    $region52: #{tpu_custom_call.1} parent=1 // pred_region
      %225 = dma.done [#allocation5], 256
    $region53: #{tpu_custom_call.1} parent=1 // pred_fallthru
      _
    %226 = vsyncpa [#allocation4], 1
    %227 = vsyncpa [#allocation7], 1
    %228 = vsyncpa [#allocation5], 1

</llo_original>
